<compile_context>
chip_gen: v6e
topology: v6e:2x2x1
jax: 0.10.0
libtpu: 0.0.40
codegen_flags: <defaults>
</compile_context>

<pallas_src>
import functools

import numpy as np
import jax
import jax.numpy as jnp
from jax.experimental import pallas as pl
from jax.experimental.pallas import tpu as pltpu


def fica_kernel(x_ref, w1_ref, w2_ref, mconv_ref, o_ref):
    # x_ref    : (Bt, C, HW) f32   (HW on the 128-lane axis, lane-dense)
    # w1_ref   : (C, hid)    bf16  (Linear(C, C//r) weight, transposed)
    # w2_ref   : (hid, C)    bf16  (Linear(C//r, C) weight, transposed)
    # mconv_ref: (2*HW, HW)  bf16  (stacked conv-as-matmul matrix [Ma; Mm])
    # o_ref    : (Bt, 1, HW) f32
    bt, c, hw = x_ref.shape

    # NaN scrub on the whole slab (VPU, lane-dense).
    x = x_ref[...]
    x = jnp.where(jnp.isnan(x), 0.0, x)                              # (Bt, C, HW)

    # --- channel attention --------------------------------------------------
    # Global avg/max pool over the lane (HW) axis -> (Bt, C) stats (XLU/VPU).
    avg_pool = jnp.sum(x, axis=-1) * (1.0 / hw)                      # (Bt, C)
    max_pool = jnp.max(x, axis=-1)                                   # (Bt, C)

    # Shared bias-free MLP, batched over the avg & max halves: exactly two
    # bf16 MXU matmuls per grid step (f32 accumulation).
    pooled = jnp.concatenate([avg_pool, max_pool], axis=0).astype(jnp.bfloat16)  # (2Bt, C)
    h = jnp.maximum(
        jnp.dot(pooled, w1_ref[...], preferred_element_type=jnp.float32), 0.0)   # (2Bt, hid)
    s = jnp.dot(h.astype(jnp.bfloat16), w2_ref[...],
                preferred_element_type=jnp.float32)                               # (2Bt, C)
    scale = s[:bt] + s[bt:]                                                       # (Bt, C)

    # Channel-scaled feature map (lane broadcast).
    cha = x * scale[:, :, None]                                                   # (Bt, C, HW)

    # --- spatial attention --------------------------------------------------
    avg_map = jnp.mean(cha, axis=1)                                               # (Bt, HW)
    max_map = jnp.max(cha, axis=1)                                                # (Bt, HW)

    # 7x7 conv (pad 3, 2 in-ch -> 1 out-ch) as ONE fused bf16 MXU matmul:
    # conv = avg_map @ Ma + max_map @ Mm, accumulated inside the MXU.
    maps = jnp.concatenate([avg_map, max_map], axis=1).astype(jnp.bfloat16)       # (Bt, 2HW)
    conv = jnp.dot(maps, mconv_ref[...], preferred_element_type=jnp.float32)      # (Bt, HW)
    conv = jnp.where(jnp.isnan(conv), 0.0, conv)

    # Sigmoid: exp and approx reciprocal both land in the (otherwise idle) EUP slot.
    o_ref[:, 0, :] = pl.reciprocal(1.0 + jnp.exp(-conv), approx=True)


@functools.lru_cache(maxsize=8)
def _conv7x7_geometry(H, W):
    """Cached O(HW^2) index build for the conv-as-matmul lowering."""
    HW = H * W
    idx = np.arange(HW)
    hh, ww = idx // W, idx % W
    kh = hh[:, None] - hh[None, :] + 3       # rows: input pixel, cols: output pixel
    kw = ww[:, None] - ww[None, :] + 3
    valid = (kh >= 0) & (kh < 7) & (kw >= 0) & (kw < 7)
    flat = np.where(valid, kh * 7 + kw, 0).astype(np.int32)
    return jnp.asarray(flat), jnp.asarray(valid)


def _conv7x7_as_matrix(wconv, H, W):
    """Lower Conv2d(2, 1, 7, padding=3, bias=False) to a stacked (2*HW, HW)
    bf16 matrix so out_flat = [avg_flat | max_flat] @ M (zero padding folded
    into the band structure)."""
    flat, valid = _conv7x7_geometry(H, W)
    wa = jnp.asarray(wconv[0, 0], jnp.float32).reshape(-1)
    wm = jnp.asarray(wconv[0, 1], jnp.float32).reshape(-1)
    ma = jnp.where(valid, wa[flat], 0.0)
    mm = jnp.where(valid, wm[flat], 0.0)
    return jnp.concatenate([ma, mm], axis=0).astype(jnp.bfloat16)     # (2*HW, HW)


def _vmem_limit_bytes():
    """Generation-aware VMEM ceiling (75% of capacity, floored at 32 MiB)."""
    try:
        cap = int(pltpu.get_tpu_info().vmem_capacity_bytes)
    except Exception:
        cap = 64 * 1024 * 1024            # conservative (v7x per-TC figure)
    return int(min(max(cap * 3 // 4, 32 * 1024 * 1024), 112 * 1024 * 1024))


def _pick_block_batch(B, C, HW, *, resident_bytes, vmem_budget, max_bt=8):
    """Largest feasible divisor of B for the batch block; prefer >=2 grid steps
    whenever B >= 2 so both v7x TensorCores get work."""
    best = 1
    for d in range(1, min(B, max_bt) + 1):
        if B % d:
            continue
        # x block double-buffered (f32) + in-kernel f32 temps (scrubbed x, cha)
        # + double-buffered output block.
        per = 2 * d * C * HW * 4 + 2 * d * C * HW * 4 + 2 * d * HW * 4
        if resident_bytes + per <= vmem_budget:
            best = d
    if B >= 2 and B // best < 2:
        for d in range(best, 0, -1):
            if B % d == 0 and B // d >= 2:
                best = d
                break
    return best


def fica_forward(x_nchw, w1, w2, wconv, *, block_batch=None):
    """x_nchw: (B, C, H, W); w1: (C//r, C); w2: (C, C//r); wconv: (1, 2, 7, 7)."""
    B, C, H, W = x_nchw.shape
    hid = w1.shape[0]
    HW = H * W

    # Free, metadata-only reshape: no NCHW->NHWC transpose pass over HBM.
    x2d = jnp.asarray(x_nchw, jnp.float32).reshape(B, C, HW)
    w1t = jnp.asarray(w1, jnp.float32).T.astype(jnp.bfloat16)        # (C, hid)
    w2t = jnp.asarray(w2, jnp.float32).T.astype(jnp.bfloat16)        # (hid, C)
    mconv = _conv7x7_as_matrix(jnp.asarray(wconv, jnp.float32), H, W)  # (2HW, HW) bf16

    vmem_budget = _vmem_limit_bytes()
    conv_mat_bytes = 2 * HW * HW * 2                                  # single-buffered bf16
    if conv_mat_bytes > vmem_budget // 2:
        # TODO(synk): fall back to a direct 98-tap shifted conv (hoisted
        # pltpu.roll lane/sublane shifts) when the dense conv matrix no longer
        # fits VMEM (large H*W, especially on v7x's 64 MiB).
        raise NotImplementedError("H*W too large for the dense conv-as-matmul path")
    resident = 2 * (C * hid) * 2 + conv_mat_bytes                     # W1+W2+Mconv, Buffered(1)

    Bt = block_batch or _pick_block_batch(
        B, C, HW, resident_bytes=resident, vmem_budget=vmem_budget)
    grid = (B // Bt,)

    cost = pl.CostEstimate(
        flops=int(B * (4 * HW * HW + 8 * C * hid + 4 * C * HW)),
        transcendentals=int(2 * B * HW),
        bytes_accessed=int(4 * B * C * HW + 4 * B * HW + 2 * 2 * HW * HW + 2 * 2 * C * hid),
    )

    grid_spec = pltpu.PrefetchScalarGridSpec(
        num_scalar_prefetch=0,
        grid=grid,
        in_specs=[
            pl.BlockSpec((Bt, C, HW), lambda b: (b, 0, 0)),            # x, lane-dense HW
            pl.BlockSpec((C, hid), lambda b: (0, 0),
                         pipeline_mode=pl.Buffered(1)),                # W1^T (resident)
            pl.BlockSpec((hid, C), lambda b: (0, 0),
                         pipeline_mode=pl.Buffered(1)),                # W2^T (resident)
            pl.BlockSpec((2 * HW, HW), lambda b: (0, 0),
                         pipeline_mode=pl.Buffered(1)),                # stacked conv matrix
        ],
        # (Bt, 1, HW) block keeps the last two dims at full/128-aligned extents.
        out_specs=pl.BlockSpec((Bt, 1, HW), lambda b: (b, 0, 0)),
    )

    out_flat = pl.pallas_call(
        fica_kernel,
        out_shape=jax.ShapeDtypeStruct((B, 1, HW), jnp.float32),
        grid_spec=grid_spec,
        compiler_params=pltpu.CompilerParams(
            dimension_semantics=("parallel",),     # shards batch across v7x TCs
            vmem_limit_bytes=vmem_budget,
        ),
        cost_estimate=cost,
    )(x2d, w1t, w2t, mconv)

    # Free reshape back to the PyTorch output convention.
    return out_flat.reshape(B, 1, H, W)


def fica_reference(x, w1, w2, wconv):
    """Pure-JAX f32 reference matching PyTorch FICA.forward exactly."""
    B, C, H, W = x.shape
    hp = jax.lax.Precision.HIGHEST
    x = jnp.where(jnp.isnan(x), 0.0, x)
    avg = jnp.mean(x, axis=(2, 3))                        # (B, C)
    mx = jnp.max(x, axis=(2, 3))                          # (B, C)

    def fc(v):
        h = jnp.maximum(jnp.dot(v, w1.T, precision=hp), 0.0)
        return jnp.dot(h, w2.T, precision=hp)

    scale = fc(avg) + fc(mx)                              # (B, C)
    cha = x * scale[:, :, None, None]
    a = jnp.mean(cha, axis=1)                             # (B, H, W)
    m = jnp.max(cha, axis=1)                              # (B, H, W)
    pa = jnp.pad(a, ((0, 0), (3, 3), (3, 3)))
    pm = jnp.pad(m, ((0, 0), (3, 3), (3, 3)))
    out = jnp.zeros((B, H, W), jnp.float32)
    for kh in range(7):
        for kw in range(7):
            out = out + wconv[0, 0, kh, kw] * pa[:, kh:kh + H, kw:kw + W]
            out = out + wconv[0, 1, kh, kw] * pm[:, kh:kh + H, kw:kw + W]
    out = jnp.where(jnp.isnan(out), 0.0, out)
    return jax.nn.sigmoid(out)[:, None, :, :]             # (B, 1, H, W)


if __name__ == "__main__":
    # Shapes consistent with FICA(channel=C, reduction=16): C // 16 >= 1.
    B, C, H, W = 2, 64, 16, 16
    reduction = 16
    hidden = C // reduction

    key = jax.random.PRNGKey(0)
    kx, k1, k2, k3 = jax.random.split(key, 4)
    x = jax.random.normal(kx, (B, C, H, W), dtype=jnp.float32)
    x = x.at[0, 0, 0, 0].set(jnp.nan)                     # exercise the nan path
    w1 = 0.1 * jax.random.normal(k1, (hidden, C), dtype=jnp.float32)   # Linear(C, C//r)
    w2 = 0.1 * jax.random.normal(k2, (C, hidden), dtype=jnp.float32)   # Linear(C//r, C)
    wconv = 0.1 * jax.random.normal(k3, (1, 2, 7, 7), dtype=jnp.float32)

    out = jax.block_until_ready(fica_forward(x, w1, w2, wconv))
    ref = jax.block_until_ready(fica_reference(x, w1, w2, wconv))

    assert out.shape == (B, 1, H, W), out.shape
    # bf16 MXU matmul inputs (+ approx reciprocal) vs the f32 scalar-accumulated
    # reference need a slightly looser tolerance than pure-f32.
    max_err = float(jnp.max(jnp.abs(out - ref)))
    assert jnp.allclose(out, ref, atol=1e-2, rtol=1e-2), max_err
    print("KERNEL_OK")
</pallas_src>

<mosaic_0001>
module attributes {stable_mosaic.version = 11 : i64} {
  func.func @fica_kernel(%arg0: i32, %arg1: memref<1x64x256xf32, #tpu.memory_space<vmem>>, %arg2: memref<64x4xbf16, #tpu.memory_space<vmem>>, %arg3: memref<4x64xbf16, #tpu.memory_space<vmem>>, %arg4: memref<512x256xbf16, #tpu.memory_space<vmem>>, %arg5: memref<1x1x256xf32, #tpu.memory_space<vmem>>) attributes {dimension_semantics = [#tpu.dimension_semantics<parallel>], iteration_bounds = array<i64: 2>, scalar_prefetch = 0 : i64, scratch_operands = 0 : i64, tpu.core_type = #tpu.core_type<tc>, window_params = [{transform_indices = @transform_0, window_bounds = array<i64: 1, 64, 256>}, {pipeline_mode = #tpu.pipeline_mode<synchronous>, transform_indices = @transform_1, window_bounds = array<i64: 64, 4>}, {pipeline_mode = #tpu.pipeline_mode<synchronous>, transform_indices = @transform_2, window_bounds = array<i64: 4, 64>}, {pipeline_mode = #tpu.pipeline_mode<synchronous>, transform_indices = @transform_3, window_bounds = array<i64: 512, 256>}, {transform_indices = @transform_4, window_bounds = array<i64: 1, 1, 256>}]} {
    %c0 = arith.constant 0 : index
    %c0_0 = arith.constant 0 : index
    %c0_1 = arith.constant 0 : index
    %0 = vector.load %arg1[%c0, %c0_0, %c0_1] : memref<1x64x256xf32, #tpu.memory_space<vmem>>, vector<1x64x256xf32>
    %1 = arith.cmpf one, %0, %0 : vector<1x64x256xf32>
    %cst = arith.constant 0.000000e+00 : f32
    %2 = vector.broadcast %cst : f32 to vector<1x64x256xf32>
    %3 = arith.select %1, %2, %0 : vector<1x64x256xi1>, vector<1x64x256xf32>
    %cst_2 = arith.constant dense<0.000000e+00> : vector<1x64xf32>
    %4 = vector.multi_reduction <add>, %3, %cst_2 [2] : vector<1x64x256xf32> to vector<1x64xf32>
    %cst_3 = arith.constant 3.906250e-03 : f32
    %5 = vector.broadcast %cst_3 : f32 to vector<1x64xf32>
    %6 = arith.mulf %4, %5 : vector<1x64xf32>
    %cst_4 = arith.constant dense<0xFF800000> : vector<1x64xf32>
    %7 = vector.multi_reduction <maximumf>, %3, %cst_4 [2] : vector<1x64x256xf32> to vector<1x64xf32>
    %8 = tpu.concatenate %6, %7 in 0 : vector<1x64xf32>, vector<1x64xf32> -> vector<2x64xf32>
    %9 = arith.truncf %8 : vector<2x64xf32> to vector<2x64xbf16>
    %c0_5 = arith.constant 0 : index
    %c0_6 = arith.constant 0 : index
    %10 = vector.load %arg2[%c0_5, %c0_6] : memref<64x4xbf16, #tpu.memory_space<vmem>>, vector<64x4xbf16>
    %cst_7 = arith.constant dense<0.000000e+00> : vector<2x4xf32>
    %11 = tpu.matmul %9, %10, %cst_7 {dimension_numbers = #tpu.dot_dimension_numbers<[1], [0], [0], [1], [0, 0, 1, 1], [], []>} : vector<2x64xbf16>, vector<64x4xbf16>, vector<2x4xf32> -> vector<2x4xf32>
    %cst_8 = arith.constant 0.000000e+00 : f32
    %12 = vector.broadcast %cst_8 : f32 to vector<2x4xf32>
    %13 = arith.maximumf %11, %12 : vector<2x4xf32>
    %14 = arith.truncf %13 : vector<2x4xf32> to vector<2x4xbf16>
    %c0_9 = arith.constant 0 : index
    %c0_10 = arith.constant 0 : index
    %15 = vector.load %arg3[%c0_9, %c0_10] : memref<4x64xbf16, #tpu.memory_space<vmem>>, vector<4x64xbf16>
    %cst_11 = arith.constant dense<0.000000e+00> : vector<2x64xf32>
    %16 = tpu.matmul %14, %15, %cst_11 {dimension_numbers = #tpu.dot_dimension_numbers<[1], [0], [0], [1], [0, 0, 1, 1], [], []>} : vector<2x4xbf16>, vector<4x64xbf16>, vector<2x64xf32> -> vector<2x64xf32>
    %17 = vector.extract_strided_slice %16 {offsets = [0, 0], sizes = [1, 64], strides = [1, 1]} : vector<2x64xf32> to vector<1x64xf32>
    %18 = vector.extract_strided_slice %16 {offsets = [1, 0], sizes = [1, 64], strides = [1, 1]} : vector<2x64xf32> to vector<1x64xf32>
    %19 = arith.addf %17, %18 : vector<1x64xf32>
    %20 = vector.shape_cast %19 : vector<1x64xf32> to vector<1x64x1xf32>
    %21 = vector.broadcast %20 : vector<1x64x1xf32> to vector<1x64x256xf32>
    %22 = arith.mulf %3, %21 : vector<1x64x256xf32>
    %cst_12 = arith.constant dense<0.000000e+00> : vector<1x256xf32>
    %23 = vector.multi_reduction <add>, %22, %cst_12 [1] : vector<1x64x256xf32> to vector<1x256xf32>
    %cst_13 = arith.constant 6.400000e+01 : f32
    %24 = vector.broadcast %cst_13 : f32 to vector<1x256xf32>
    %25 = arith.divf %23, %24 : vector<1x256xf32>
    %cst_14 = arith.constant dense<0xFF800000> : vector<1x256xf32>
    %26 = vector.multi_reduction <maximumf>, %22, %cst_14 [1] : vector<1x64x256xf32> to vector<1x256xf32>
    %27 = tpu.concatenate %25, %26 in 1 : vector<1x256xf32>, vector<1x256xf32> -> vector<1x512xf32>
    %28 = arith.truncf %27 : vector<1x512xf32> to vector<1x512xbf16>
    %c0_15 = arith.constant 0 : index
    %c0_16 = arith.constant 0 : index
    %29 = vector.load %arg4[%c0_15, %c0_16] : memref<512x256xbf16, #tpu.memory_space<vmem>>, vector<512x256xbf16>
    %cst_17 = arith.constant dense<0.000000e+00> : vector<1x256xf32>
    %30 = tpu.matmul %28, %29, %cst_17 {dimension_numbers = #tpu.dot_dimension_numbers<[1], [0], [0], [1], [0, 0, 1, 1], [], []>} : vector<1x512xbf16>, vector<512x256xbf16>, vector<1x256xf32> -> vector<1x256xf32>
    %31 = arith.cmpf one, %30, %30 : vector<1x256xf32>
    %cst_18 = arith.constant 0.000000e+00 : f32
    %32 = vector.broadcast %cst_18 : f32 to vector<1x256xf32>
    %33 = arith.select %31, %32, %30 : vector<1x256xi1>, vector<1x256xf32>
    %cst_19 = arith.constant 0.000000e+00 : f32
    %34 = vector.broadcast %cst_19 : f32 to vector<1x256xf32>
    %35 = arith.subf %34, %33 : vector<1x256xf32>
    %36 = math.exp %35 : vector<1x256xf32>
    %cst_20 = arith.constant 1.000000e+00 : f32
    %37 = vector.broadcast %cst_20 : f32 to vector<1x256xf32>
    %38 = arith.addf %37, %36 : vector<1x256xf32>
    %39 = tpu.reciprocal %38 {approx = true} : vector<1x256xf32> -> vector<1x256xf32>
    %c0_21 = arith.constant 0 : index
    %c0_22 = arith.constant 0 : index
    %c0_23 = arith.constant 0 : index
    %40 = vector.load %arg5[%c0_21, %c0_22, %c0_23] : memref<1x1x256xf32, #tpu.memory_space<vmem>>, vector<1x1x256xf32>
    %41 = vector.shape_cast %40 : vector<1x1x256xf32> to vector<1x256xf32>
    %42 = vector.shape_cast %39 : vector<1x256xf32> to vector<1x1x256xf32>
    tpu.vector_store %arg5[%c0_21, %c0_22, %c0_23], %42 {strides = array<i32>} : memref<1x1x256xf32, #tpu.memory_space<vmem>>, vector<1x1x256xf32>,
    return
  }
  func.func @transform_0(%arg0: i32) -> (i32, i32, i32) {
    %c0_i32 = arith.constant 0 : i32
    %c0_i32_0 = arith.constant 0 : i32
    %c0_i32_1 = arith.constant 0 : i32
    return %arg0, %c0_i32, %c0_i32_0 : i32, i32, i32
  }
  func.func @transform_1(%arg0: i32) -> (i32, i32) {
    %c0_i32 = arith.constant 0 : i32
    %c0_i32_0 = arith.constant 0 : i32
    %c0_i32_1 = arith.constant 0 : i32
    return %c0_i32, %c0_i32_0 : i32, i32
  }
  func.func @transform_2(%arg0: i32) -> (i32, i32) {
    %c0_i32 = arith.constant 0 : i32
    %c0_i32_0 = arith.constant 0 : i32
    %c0_i32_1 = arith.constant 0 : i32
    return %c0_i32, %c0_i32_0 : i32, i32
  }
  func.func @transform_3(%arg0: i32) -> (i32, i32) {
    %c0_i32 = arith.constant 0 : i32
    %c0_i32_0 = arith.constant 0 : i32
    %c0_i32_1 = arith.constant 0 : i32
    return %c0_i32, %c0_i32_0 : i32, i32
  }
  func.func @transform_4(%arg0: i32) -> (i32, i32, i32) {
    %c0_i32 = arith.constant 0 : i32
    %c0_i32_0 = arith.constant 0 : i32
    %c0_i32_1 = arith.constant 0 : i32
    return %arg0, %c0_i32, %c0_i32_0 : i32, i32, i32
  }
}

</mosaic_0001>

<llo_original>
// kernel: tpu_custom_call.1
$region0: #{tpu_custom_call.1}
  #allocation0 [shape = 'u32[]', space=smem, size = 0x4, offset = 0x4, fixed_abs, tag = 'smem constant byte address 0x4 - core index']
  #allocation1 [shape = 'u32[144,128]{1,0:T(1,128)}', space=vmem, size = 0x12000, scoped, tag = 'internal scratch']
  %s0 = inlined_call_operand.hbm [shape: f32[2,64,256], index: 0, kind: input, shape index: {}]
  %s1 = inlined_call_operand.vmem [shape: bf16[64,4], index: 1, kind: input, shape index: {}]
  %s2 = inlined_call_operand.vmem [shape: bf16[4,64], index: 2, kind: input, shape index: {}]
  %s3 = inlined_call_operand.hbm [shape: bf16[512,256], index: 3, kind: input, shape index: {}]
  %s4 = inlined_call_operand.hbm [shape: f32[2,1,256], index: 4, kind: output, shape index: {}]
  %s5 = sld [smem:[#allocation0]]
  $region57: #{tpu_custom_call.1} parent=0
    _
  %s7 = ssub.s32 1, %s5
  %s8 = scalar_select 0, %s7, %s5
  $region1: #{tpu_custom_call.1} parent=0
    #allocation2 [shape = 'u8[131072]{0}', space=vmem, size = 0x20000, scoped, tag = 'input window, operand 0']
    #allocation3 [shape = 's32[2]{0}', space=sflag, size = 0x8, scoped, tag = 'scoped memory for tpu_custom_call.1']
    #allocation4 [shape = 's32[2]{0}', space=sflag, size = 0x8, scoped, tag = 'scoped memory for tpu_custom_call.1']
    #allocation5 [shape = 'u8[262144]{0}', space=vmem, size = 0x40000, scoped, tag = 'input window, operand 3, single buffered']
    #allocation6 [shape = 's32[1]{0}', space=sflag, size = 0x4, scoped, tag = 'scoped memory for tpu_custom_call.1']
    #allocation7 [shape = 'u8[2048]{0}', space=vmem, size = 0x800, scoped, tag = 'output window, operand 0']
    %9 = vsyncpa [#allocation3], 0
    %s10 = scalar_lea.sflag [#allocation3], 1
    %11 = vsyncpa %s10, 0
    %12 = vsyncpa [#allocation6], 0
    %13 = vsyncpa [#allocation4], 0
    %s14 = scalar_lea.sflag [#allocation4], 1
    %15 = vsyncpa %s14, 0
    loop: start=0, step=1, limit=4
    $region2: #{tpu_custom_call.1} parent=1 // loop_pre_header
      _
    $region3: #{tpu_custom_call.1} parent=1 // loop_header
      %s17 = sphi 0, %s21
      %p18 = scmp.ge.s32.totalorder %s17, 4
      %s27 = sphi 0, %s29
      %s30 = sphi 0, %s27
      %s31 = sphi 0, %s30
      %s47 = sphi 0, %s31
      %s51 = sphi 0, %s51
      %s53 = sphi 0, %s51
      %s54 = sphi 0, %s53
      %s68 = sphi 0, %s54
      %s72 = sphi 0, %s72
      %s74 = sphi 0, %s72
      %s75 = sphi 0, %s74
      %s89 = sphi 0, %s75
      %s93 = sphi 0, %s93
      %s95 = sphi 0, %s93
      %s96 = sphi 0, %s95
      %s110 = sphi 0, %s96
      %s116 = sphi 0, %s118
      %s119 = sphi 0, %s116
      %s120 = sphi 0, %s119
      %s136 = sphi 0, %s120
    $region4: #{tpu_custom_call.1} parent=1 // loop_header_branch
      %20 = sbr.rel (%p18) target = $region8
    $region5: #{tpu_custom_call.1} parent=1 // loop_body
      %s22 = ssub.s32 %s17, 1
      %s23 = ssub.s32 %s17, 2
      %s24 = sadd.s32 %s17, 1
      %s25 = ssub.s32 %s17, %s24
      %p26 = scmp.eq.s32.totalorder %s25, 0
      %s28 = sadd.s32 %s27, 1
      %s29 = scalar_select %p26, %s27, %s28
      %p32 = pneg %p26
      %p33 = scmp.eq.s32.totalorder %s17, 1
      %p34 = por %p32, %p33
      %p35 = scmp.ne.s32.totalorder %s27, %s30
      %p36 = scmp.eq.s32.totalorder %s17, 0
      %p37 = por %p35, %p36
      %p38 = scmp.ne.s32.totalorder %s27, %s30
      %p39 = scmp.eq.s32.totalorder %s22, 1
      %p40 = por %p38, %p39
      %p41 = scmp.ne.s32.totalorder %s30, %s31
      %p42 = scmp.eq.s32.totalorder %s22, 0
      %p43 = por %p41, %p42
      %p44 = scmp.ne.s32.totalorder %s30, %s31
      %p45 = scmp.eq.s32.totalorder %s23, 1
      %p46 = por %p44, %p45
      %p48 = scmp.ne.s32.totalorder %s31, %s47
      %p49 = scmp.eq.s32.totalorder %s23, 0
      %p50 = por %p48, %p49
      %s52 = sadd.s32 %s51, 1
      %p55 = scmp.eq.s32.totalorder %s17, 1
      %p56 = scmp.ne.s32.totalorder %s51, %s53
      %p57 = scmp.eq.s32.totalorder %s17, 0
      %p58 = por %p56, %p57
      %p59 = scmp.ne.s32.totalorder %s51, %s53
      %p60 = scmp.eq.s32.totalorder %s22, 1
      %p61 = por %p59, %p60
      %p62 = scmp.ne.s32.totalorder %s53, %s54
      %p63 = scmp.eq.s32.totalorder %s22, 0
      %p64 = por %p62, %p63
      %p65 = scmp.ne.s32.totalorder %s53, %s54
      %p66 = scmp.eq.s32.totalorder %s23, 1
      %p67 = por %p65, %p66
      %p69 = scmp.ne.s32.totalorder %s54, %s68
      %p70 = scmp.eq.s32.totalorder %s23, 0
      %p71 = por %p69, %p70
      %s73 = sadd.s32 %s72, 1
      %p76 = scmp.eq.s32.totalorder %s17, 1
      %p77 = scmp.ne.s32.totalorder %s72, %s74
      %p78 = scmp.eq.s32.totalorder %s17, 0
      %p79 = por %p77, %p78
      %p80 = scmp.ne.s32.totalorder %s72, %s74
      %p81 = scmp.eq.s32.totalorder %s22, 1
      %p82 = por %p80, %p81
      %p83 = scmp.ne.s32.totalorder %s74, %s75
      %p84 = scmp.eq.s32.totalorder %s22, 0
      %p85 = por %p83, %p84
      %p86 = scmp.ne.s32.totalorder %s74, %s75
      %p87 = scmp.eq.s32.totalorder %s23, 1
      %p88 = por %p86, %p87
      %p90 = scmp.ne.s32.totalorder %s75, %s89
      %p91 = scmp.eq.s32.totalorder %s23, 0
      %p92 = por %p90, %p91
      %s94 = sadd.s32 %s93, 1
      %p97 = scmp.eq.s32.totalorder %s17, 1
      %p98 = scmp.ne.s32.totalorder %s93, %s95
      %p99 = scmp.eq.s32.totalorder %s17, 0
      %p100 = por %p98, %p99
      %p101 = scmp.ne.s32.totalorder %s93, %s95
      %p102 = scmp.eq.s32.totalorder %s22, 1
      %p103 = por %p101, %p102
      %p104 = scmp.ne.s32.totalorder %s95, %s96
      %p105 = scmp.eq.s32.totalorder %s22, 0
      %p106 = por %p104, %p105
      %p107 = scmp.ne.s32.totalorder %s95, %s96
      %p108 = scmp.eq.s32.totalorder %s23, 1
      %p109 = por %p107, %p108
      %p111 = scmp.ne.s32.totalorder %s96, %s110
      %p112 = scmp.eq.s32.totalorder %s23, 0
      %p113 = por %p111, %p112
      %s114 = ssub.s32 %s17, %s24
      %p115 = scmp.eq.s32.totalorder %s114, 0
      %s117 = sadd.s32 %s116, 1
      %s118 = scalar_select %p115, %s116, %s117
      %p121 = pneg %p115
      %p122 = scmp.eq.s32.totalorder %s17, 1
      %p123 = por %p121, %p122
      %p124 = scmp.ne.s32.totalorder %s116, %s119
      %p125 = scmp.eq.s32.totalorder %s17, 0
      %p126 = por %p124, %p125
      %p127 = scmp.ne.s32.totalorder %s116, %s119
      %p128 = scmp.eq.s32.totalorder %s22, 1
      %p129 = por %p127, %p128
      %p130 = scmp.ne.s32.totalorder %s119, %s120
      %p131 = scmp.eq.s32.totalorder %s22, 0
      %p132 = por %p130, %p131
      %p133 = scmp.ne.s32.totalorder %s119, %s120
      %p134 = scmp.eq.s32.totalorder %s23, 1
      %p135 = por %p133, %p134
      %p137 = scmp.ne.s32.totalorder %s120, %s136
      %p138 = scmp.eq.s32.totalorder %s23, 0
      %p139 = por %p137, %p138
      %p140 = scmp.le.s32.totalorder 1, %s17
      %p141 = scmp.lt.s32.totalorder %s17, 3
      %p142 = pnand %p140, %p141
      %p143 = pneg %p142
      // Predicated region
      $region9: #{tpu_custom_call.1} parent=5 // pred_check
        _
      $region10: #{tpu_custom_call.1} parent=5 // pred_check_branch
        %145 = sbr.rel (%p142) target = $region12
      $region11: #{tpu_custom_call.1} parent=5 // pred_region
        %s146 = ssub.s32 %s17, 1
        // Predicated region
        $region13: #{tpu_custom_call.1} parent=11 // pred_check
          %p147 = pneg %p64
        $region14: #{tpu_custom_call.1} parent=11 // pred_check_branch
          %149 = sbr.rel (%p147) target = $region16
        $region15: #{tpu_custom_call.1} parent=11 // pred_region
          _
        $region16: #{tpu_custom_call.1} parent=11 // pred_fallthru
          _
        // Predicated region
        $region17: #{tpu_custom_call.1} parent=11 // pred_check
          %p150 = pneg %p85
        $region18: #{tpu_custom_call.1} parent=11 // pred_check_branch
          %152 = sbr.rel (%p150) target = $region20
        $region19: #{tpu_custom_call.1} parent=11 // pred_region
          _
        $region20: #{tpu_custom_call.1} parent=11 // pred_fallthru
          _
        // Predicated region
        $region21: #{tpu_custom_call.1} parent=11 // pred_check
          %p153 = pneg %p106
        $region22: #{tpu_custom_call.1} parent=11 // pred_check_branch
          %155 = sbr.rel (%p153) target = $region24
        $region23: #{tpu_custom_call.1} parent=11 // pred_region
          %s157 = ssub.s32 8192, 8192
          %158 = vsyncadd [#allocation6], %s157
          %s159 = sshll.u32 [#allocation5], 4
          %s160 = int_to_ptr.vmem [resolvable:$true] %s159
          %165 = dma.hbm_to_vmem [thread:$0]  %s3, 8192, %s160, [#allocation6], 128, 128, 8
        $region24: #{tpu_custom_call.1} parent=11 // pred_fallthru
          _
      $region12: #{tpu_custom_call.1} parent=5 // pred_fallthru
        _
      %p166 = scmp.lt.s32.totalorder %s17, 2
      // Predicated region
      $region25: #{tpu_custom_call.1} parent=5 // pred_check
        %p167 = pneg %p166
      $region26: #{tpu_custom_call.1} parent=5 // pred_check_branch
        %169 = sbr.rel (%p167) target = $region28
      $region27: #{tpu_custom_call.1} parent=5 // pred_region
        // Predicated region
        $region29: #{tpu_custom_call.1} parent=27 // pred_check
          %p170 = pneg %p37
        $region30: #{tpu_custom_call.1} parent=27 // pred_check_branch
          %172 = sbr.rel (%p170) target = $region32
        $region31: #{tpu_custom_call.1} parent=27 // pred_region
          %s173 = sand.u32 %s27, 1
          %s174 = scalar_lea.sflag [#allocation3], %s173
          %s175 = sand.u32 %s27, 1
          %s176 = smul.addr %s175, 128
          %s177 = scalar_lea.vmem [#allocation2], %s176
          %s179 = ssub.s32 2048, 2048
          %180 = vsyncadd %s174, %s179
          %s181 = smul.addr %s17, 16
          %s182 = smul.addr %s181, 128
          %s183 = scalar_lea.hbm %s0, %s182
          %s184 = sshll.u32 %s177, 4
          %s185 = int_to_ptr.vmem [resolvable:$true] %s184
          %190 = dma.hbm_to_vmem [thread:$0]  %s183, 2048, %s185, %s174, 256, 256, 16
        $region32: #{tpu_custom_call.1} parent=27 // pred_fallthru
          _
      $region28: #{tpu_custom_call.1} parent=5 // pred_fallthru
        _
      %p191 = scmp.le.s32.totalorder 1, %s17
      %p192 = scmp.lt.s32.totalorder %s17, 3
      %p193 = pnand %p191, %p192
      %p194 = pneg %p193
      // Predicated region
      $region33: #{tpu_custom_call.1} parent=5 // pred_check
        _
      $region34: #{tpu_custom_call.1} parent=5 // pred_check_branch
        %196 = sbr.rel (%p193) target = $region36
      $region35: #{tpu_custom_call.1} parent=5 // pred_region
        %s197 = ssub.s32 %s17, 1
        %s198 = sand.u32 %s30, 1
        %s199 = scalar_lea.sflag [#allocation3], %s198
        %s200 = sand.u32 %s30, 1
        %s201 = smul.addr %s200, 128
        %s202 = scalar_lea.vmem [#allocation2], %s201
        // Predicated region
        $region37: #{tpu_custom_call.1} parent=35 // pred_check
          %p203 = pneg %p43
        $region38: #{tpu_custom_call.1} parent=35 // pred_check_branch
          %205 = sbr.rel (%p203) target = $region40
        $region39: #{tpu_custom_call.1} parent=35 // pred_region
          %206 = dma.done %s199, 2048
        $region40: #{tpu_custom_call.1} parent=35 // pred_fallthru
          _
        // Predicated region
        $region41: #{tpu_custom_call.1} parent=35 // pred_check
          %p207 = pneg %p106
        $region42: #{tpu_custom_call.1} parent=35 // pred_check_branch
          %209 = sbr.rel (%p207) target = $region44
        $region43: #{tpu_custom_call.1} parent=35 // pred_region
          %210 = dma.done [#allocation6], 8192
        $region44: #{tpu_custom_call.1} parent=35 // pred_fallthru
          _
        %s211 = sand.u32 %s30, 1
        %s212 = scalar_lea.sflag [#allocation3], %s211
        %s213 = sand.u32 %s30, 1
        %s214 = smul.addr %s213, 128
        %s215 = scalar_lea.vmem [#allocation2], %s214
        %p216 = pneg %p43
        %p217 = pneg %p40
        %p218 = pneg %p64
        %p219 = pneg %p61
        %p220 = pneg %p85
        %p221 = pneg %p82
        %p222 = pneg %p106
        %p223 = pneg %p103
        %p224 = pneg %p132
        %p225 = pneg %p129
        %s226 = sand.u32 %s119, 1
        %s227 = scalar_lea.sflag [#allocation4], %s226
        %s228 = sand.u32 %s119, 1
        %s229 = smul.addr %s228, 2
        %s230 = scalar_lea.vmem [#allocation7], %s229
        %v232 = vld [vmem:[%s202] sm:$0xff]
        %v233 = vld [vmem:[%s202 + $0x8] sm:$0xff]
        %v234 = vld [vmem:[%s202 + $0x10] sm:$0xff]
        %v235 = vld [vmem:[%s202 + $0x18] sm:$0xff]
        %v236 = vld [vmem:[%s202 + $0x20] sm:$0xff]
        %v237 = vld [vmem:[%s202 + $0x28] sm:$0xff]
        %v238 = vld [vmem:[%s202 + $0x30] sm:$0xff]
        %v239 = vld [vmem:[%s202 + $0x38] sm:$0xff]
        %v240 = vld [vmem:[%s202 + $0x40] sm:$0xff]
        %v241 = vld [vmem:[%s202 + $0x48] sm:$0xff]
        %v242 = vld [vmem:[%s202 + $0x50] sm:$0xff]
        %v243 = vld [vmem:[%s202 + $0x58] sm:$0xff]
        %v244 = vld [vmem:[%s202 + $0x60] sm:$0xff]
        %v245 = vld [vmem:[%s202 + $0x68] sm:$0xff]
        %v246 = vld [vmem:[%s202 + $0x70] sm:$0xff]
        %v247 = vld [vmem:[%s202 + $0x78] sm:$0xff]
        %vm248 = vcmp.ne.f32.partialorder %v232, %v232
        %vm249 = vcmp.ne.f32.partialorder %v233, %v233
        %vm250 = vcmp.ne.f32.partialorder %v234, %v234
        %vm251 = vcmp.ne.f32.partialorder %v235, %v235
        %vm252 = vcmp.ne.f32.partialorder %v236, %v236
        %vm253 = vcmp.ne.f32.partialorder %v237, %v237
        %vm254 = vcmp.ne.f32.partialorder %v238, %v238
        %vm255 = vcmp.ne.f32.partialorder %v239, %v239
        %vm256 = vcmp.ne.f32.partialorder %v240, %v240
        %vm257 = vcmp.ne.f32.partialorder %v241, %v241
        %vm258 = vcmp.ne.f32.partialorder %v242, %v242
        %vm259 = vcmp.ne.f32.partialorder %v243, %v243
        %vm260 = vcmp.ne.f32.partialorder %v244, %v244
        %vm261 = vcmp.ne.f32.partialorder %v245, %v245
        %vm262 = vcmp.ne.f32.partialorder %v246, %v246
        %vm263 = vcmp.ne.f32.partialorder %v247, %v247
        %v264 = vsel %vm248, 0.0, %v232
        %v265 = vsel %vm249, 0.0, %v233
        %v266 = vsel %vm250, 0.0, %v234
        %v267 = vsel %vm251, 0.0, %v235
        %v268 = vsel %vm252, 0.0, %v236
        %v269 = vsel %vm253, 0.0, %v237
        %v270 = vsel %vm254, 0.0, %v238
        %v271 = vsel %vm255, 0.0, %v239
        %v272 = vsel %vm256, 0.0, %v240
        %v273 = vsel %vm257, 0.0, %v241
        %v274 = vsel %vm258, 0.0, %v242
        %v275 = vsel %vm259, 0.0, %v243
        %v276 = vsel %vm260, 0.0, %v244
        %v277 = vsel %vm261, 0.0, %v245
        %v278 = vsel %vm262, 0.0, %v246
        %v279 = vsel %vm263, 0.0, %v247
        %v280 = vadd.f32 %v264, %v265
        %281 = vadd.xlane.f32.xlu0 %v280
        %v282 = vpop.xlane.xlu0 %281
        %v283 = vadd.f32 %v266, %v267
        %284 = vadd.xlane.f32.xlu0 %v283
        %v285 = vpop.xlane.xlu0 %284
        %v286 = vadd.f32 %v268, %v269
        %287 = vadd.xlane.f32.xlu0 %v286
        %v288 = vpop.xlane.xlu0 %287
        %v289 = vadd.f32 %v270, %v271
        %290 = vadd.xlane.f32.xlu0 %v289
        %v291 = vpop.xlane.xlu0 %290
        %v292 = vadd.f32 %v272, %v273
        %293 = vadd.xlane.f32.xlu0 %v292
        %v294 = vpop.xlane.xlu0 %293
        %v295 = vadd.f32 %v274, %v275
        %296 = vadd.xlane.f32.xlu0 %v295
        %v297 = vpop.xlane.xlu0 %296
        %v298 = vadd.f32 %v276, %v277
        %299 = vadd.xlane.f32.xlu0 %v298
        %v300 = vpop.xlane.xlu0 %299
        %v301 = vadd.f32 %v278, %v279
        %302 = vadd.xlane.f32.xlu0 %v301
        %v303 = vpop.xlane.xlu0 %302
        %v304 = vmul.f32 %v282, 0.00390625
        %v305 = vmul.f32 %v285, 0.00390625
        %v306 = vmul.f32 %v288, 0.00390625
        %v307 = vmul.f32 %v291, 0.00390625
        %v308 = vmul.f32 %v294, 0.00390625
        %v309 = vmul.f32 %v297, 0.00390625
        %v310 = vmul.f32 %v300, 0.00390625
        %v311 = vmul.f32 %v303, 0.00390625
        %v312 = vmax.f32 %v264, %v265
        %313 = vmax.xlane.f32.xlu0 %v312
        %v314 = vpop.xlane.xlu0 %313
        %v315 = vmax.f32 %v266, %v267
        %316 = vmax.xlane.f32.xlu0 %v315
        %v317 = vpop.xlane.xlu0 %316
        %v318 = vmax.f32 %v268, %v269
        %319 = vmax.xlane.f32.xlu0 %v318
        %v320 = vpop.xlane.xlu0 %319
        %v321 = vmax.f32 %v270, %v271
        %322 = vmax.xlane.f32.xlu0 %v321
        %v323 = vpop.xlane.xlu0 %322
        %v324 = vmax.f32 %v272, %v273
        %325 = vmax.xlane.f32.xlu0 %v324
        %v326 = vpop.xlane.xlu0 %325
        %v327 = vmax.f32 %v274, %v275
        %328 = vmax.xlane.f32.xlu0 %v327
        %v329 = vpop.xlane.xlu0 %328
        %v330 = vmax.f32 %v276, %v277
        %331 = vmax.xlane.f32.xlu0 %v330
        %v332 = vpop.xlane.xlu0 %331
        %v333 = vmax.f32 %v278, %v279
        %334 = vmax.xlane.f32.xlu0 %v333
        %v335 = vpop.xlane.xlu0 %334
        %v344 = vlaneseq
        %v345 = vand.u32 %v344, 127
        %v346 = vlaneseq
        %v347 = vshrl.u32 %v346, 7
        %v348 = vsub.s32 %v345, %v347
        %v349 = vrot.slane %v304, %v348
        %v350 = vadd.s32 %v345, 4294967288
        %v351 = vlaneseq
        %v352 = vshrl.u32 %v351, 7
        %v353 = vsub.s32 %v350, %v352
        %v354 = vrot.slane %v305, %v353
        %vm355 = vcmask 130112
        %v356 = vsel %vm355, %v354, %v349
        %v357 = vadd.s32 %v345, 4294967280
        %v358 = vlaneseq
        %v359 = vshrl.u32 %v358, 7
        %v360 = vsub.s32 %v357, %v359
        %v361 = vrot.slane %v306, %v360
        %vm362 = vcmask 195712
        %v363 = vsel %vm362, %v361, %v356
        %v364 = vadd.s32 %v345, 4294967272
        %v365 = vlaneseq
        %v366 = vshrl.u32 %v365, 7
        %v367 = vsub.s32 %v364, %v366
        %v368 = vrot.slane %v307, %v367
        %vm369 = vcmask 261312
        %v370 = vsel %vm369, %v368, %v363
        %v371 = vadd.s32 %v345, 4294967264
        %v372 = vlaneseq
        %v373 = vshrl.u32 %v372, 7
        %v374 = vsub.s32 %v371, %v373
        %v375 = vrot.slane %v308, %v374
        %vm376 = vcmask 326912
        %v377 = vsel %vm376, %v375, %v370
        %v378 = vadd.s32 %v345, 4294967256
        %v379 = vlaneseq
        %v380 = vshrl.u32 %v379, 7
        %v381 = vsub.s32 %v378, %v380
        %v382 = vrot.slane %v309, %v381
        %vm383 = vcmask 392512
        %v384 = vsel %vm383, %v382, %v377
        %v385 = vadd.s32 %v345, 4294967248
        %v386 = vlaneseq
        %v387 = vshrl.u32 %v386, 7
        %v388 = vsub.s32 %v385, %v387
        %v389 = vrot.slane %v310, %v388
        %vm390 = vcmask 458112
        %v391 = vsel %vm390, %v389, %v384
        %v392 = vadd.s32 %v345, 4294967240
        %v393 = vlaneseq
        %v394 = vshrl.u32 %v393, 7
        %v395 = vsub.s32 %v392, %v394
        %v396 = vrot.slane %v311, %v395
        %vm397 = vcmask 523712
        %v398 = vsel %vm397, %v396, %v391
        %v408 = vlaneseq
        %v409 = vshrl.u32 %v408, 7
        %v410 = vsub.s32 %v345, %v409
        %v411 = vrot.slane %v314, %v410
        %v412 = vlaneseq
        %v413 = vshrl.u32 %v412, 7
        %v414 = vsub.s32 %v350, %v413
        %v415 = vrot.slane %v317, %v414
        %v416 = vsel %vm355, %v415, %v411
        %v417 = vlaneseq
        %v418 = vshrl.u32 %v417, 7
        %v419 = vsub.s32 %v357, %v418
        %v420 = vrot.slane %v320, %v419
        %v421 = vsel %vm362, %v420, %v416
        %v422 = vlaneseq
        %v423 = vshrl.u32 %v422, 7
        %v424 = vsub.s32 %v364, %v423
        %v425 = vrot.slane %v323, %v424
        %v426 = vsel %vm369, %v425, %v421
        %v427 = vlaneseq
        %v428 = vshrl.u32 %v427, 7
        %v429 = vsub.s32 %v371, %v428
        %v430 = vrot.slane %v326, %v429
        %v431 = vsel %vm376, %v430, %v426
        %v432 = vlaneseq
        %v433 = vshrl.u32 %v432, 7
        %v434 = vsub.s32 %v378, %v433
        %v435 = vrot.slane %v329, %v434
        %v436 = vsel %vm383, %v435, %v431
        %v437 = vlaneseq
        %v438 = vshrl.u32 %v437, 7
        %v439 = vsub.s32 %v385, %v438
        %v440 = vrot.slane %v332, %v439
        %v441 = vsel %vm390, %v440, %v436
        %v442 = vlaneseq
        %v443 = vshrl.u32 %v442, 7
        %v444 = vsub.s32 %v392, %v443
        %v445 = vrot.slane %v335, %v444
        %v446 = vsel %vm397, %v445, %v441
        %vm448 = vcmask 1040384
        %v449 = vsel %vm448, %v398, %v446
        %v450 = vpack.c.bf16 %v449, %v449
        %v451 = vld [vmem:[%s1] sm:$0xf]
        %v452 = vld [vmem:[%s1 + $0x4] sm:$0xf]
        %v453 = vld [vmem:[%s1 + $0x8] sm:$0xf]
        %v454 = vld [vmem:[%s1 + $0xc] sm:$0xf]
        %v455 = vld [vmem:[%s1 + $0x10] sm:$0xf]
        %v456 = vld [vmem:[%s1 + $0x14] sm:$0xf]
        %v457 = vld [vmem:[%s1 + $0x18] sm:$0xf]
        %v458 = vld [vmem:[%s1 + $0x1c] sm:$0xf]
        %v467 = vunpack.c.l.b16 %v451
        %v468 = vunpack.c.l.b16 %v452
        %v469 = vunpack.c.l.b16 %v453
        %v470 = vunpack.c.l.b16 %v454
        %v471 = vunpack.c.l.b16 %v455
        %v472 = vunpack.c.l.b16 %v456
        %v473 = vunpack.c.l.b16 %v457
        %v474 = vunpack.c.l.b16 %v458
        %v475 = vpack.c.b16 %v468, %v467
        %v476 = vpack.c.b16 %v470, %v469
        %v477 = vpack.c.b16 %v472, %v471
        %v478 = vpack.c.b16 %v474, %v473
        %vm483 = vcmask 523264
        %v485 = vsel %vm483, %v450, 0
        %487 = vmatprep.subr.bf16.mxu0 0
        %488 = vmatpush1.bf16.msra.mxu0 0
        %489 = vmatprep.subr.bf16.mxu0 0
        %490 = vmatpush1.bf16.msra.mxu0 0
        %491 = vmatprep.subr.bf16.mxu0 0
        %492 = vmatpush1.bf16.msra.mxu0 0
        %493 = vmatprep.subr.bf16.mxu0 0
        %494 = vmatpush1.bf16.msra.mxu0 0
        %495 = vmatprep.subr.bf16.mxu0 0
        %496 = vmatpush1.bf16.msra.mxu0 %v478
        %497 = vmatprep.subr.bf16.mxu0 0
        %498 = vmatpush1.bf16.msra.mxu0 %v477
        %499 = vmatprep.subr.bf16.mxu0 0
        %500 = vmatpush1.bf16.msra.mxu0 %v476
        %501 = vmatprep.subr.bf16.mxu0 0
        %502 = vmatpush1.bf16.msra.mxu0 %v475
        %503 = vmatprep.subr.bf16.mxu0 0
        %504 = vmatpush2.bf16.msra.mxu0 0
        %505 = vmatprep.subr.bf16.mxu0 0
        %506 = vmatpush2.bf16.msra.mxu0 0
        %507 = vmatprep.subr.bf16.mxu0 0
        %508 = vmatpush2.bf16.msra.mxu0 0
        %509 = vmatprep.subr.bf16.mxu0 0
        %510 = vmatpush2.bf16.msra.mxu0 0
        %511 = vmatprep.subr.bf16.mxu0 0
        %512 = vmatpush2.bf16.msra.mxu0 0
        %513 = vmatprep.subr.bf16.mxu0 0
        %514 = vmatpush2.bf16.msra.mxu0 0
        %515 = vmatprep.subr.bf16.mxu0 0
        %516 = vmatpush2.bf16.msra.mxu0 0
        %517 = vmatprep.subr.bf16.mxu0 0
        %518 = vmatpush2.bf16.msra.mxu0 0
        %519 = vmatprep.mubr.bf16.mxu0 0
        %520 = vmatmul.mubr.bf16.gmra.mxu0 %v485
        %v521 = vpop.f32.mrf.mxu0
        %v522 = vadd.f32 0.0, %v521
        %v523 = vpop.f32.mrf.mxu0
        %v524 = vpop.f32.mrf.mxu0
        %v525 = vpop.f32.mrf.mxu0
        %526 = vdwg.mxu0
        %v527 = vmax.f32 %v522, 0.0
        %v528 = vpack.c.bf16 %v527, %v527
        %v529 = vld [vmem:[%s2] sm:$0x3]
        %vm530 = vcmask 31744
        %v532 = vsel %vm530, %v528, 0
        %vm534 = vcmask 1041408
        %v536 = vsel %vm534, %v529, 0
        %538 = vmatprep.subr.bf16.mxu0 0
        %539 = vmatpush1.bf16.msra.mxu0 0
        %540 = vmatprep.subr.bf16.mxu0 0
        %541 = vmatpush1.bf16.msra.mxu0 0
        %542 = vmatprep.subr.bf16.mxu0 0
        %543 = vmatpush1.bf16.msra.mxu0 0
        %544 = vmatprep.subr.bf16.mxu0 0
        %545 = vmatpush1.bf16.msra.mxu0 0
        %546 = vmatprep.subr.bf16.mxu0 0
        %547 = vmatpush1.bf16.msra.mxu0 0
        %548 = vmatprep.subr.bf16.mxu0 0
        %549 = vmatpush1.bf16.msra.mxu0 0
        %550 = vmatprep.subr.bf16.mxu0 0
        %551 = vmatpush1.bf16.msra.mxu0 0
        %552 = vmatprep.subr.bf16.mxu0 0
        %553 = vmatpush1.bf16.msra.mxu0 %v536
        %554 = vmatprep.subr.bf16.mxu0 0
        %555 = vmatpush2.bf16.msra.mxu0 0
        %556 = vmatprep.subr.bf16.mxu0 0
        %557 = vmatpush2.bf16.msra.mxu0 0
        %558 = vmatprep.subr.bf16.mxu0 0
        %559 = vmatpush2.bf16.msra.mxu0 0
        %560 = vmatprep.subr.bf16.mxu0 0
        %561 = vmatpush2.bf16.msra.mxu0 0
        %562 = vmatprep.subr.bf16.mxu0 0
        %563 = vmatpush2.bf16.msra.mxu0 0
        %564 = vmatprep.subr.bf16.mxu0 0
        %565 = vmatpush2.bf16.msra.mxu0 0
        %566 = vmatprep.subr.bf16.mxu0 0
        %567 = vmatpush2.bf16.msra.mxu0 0
        %568 = vmatprep.subr.bf16.mxu0 0
        %569 = vmatpush2.bf16.msra.mxu0 0
        %570 = vmatprep.mubr.bf16.mxu0 0
        %571 = vmatmul.mubr.bf16.gmra.mxu0 %v532
        %v572 = vpop.f32.mrf.mxu0
        %v573 = vadd.f32 0.0, %v572
        %v574 = vpop.f32.mrf.mxu0
        %v575 = vpop.f32.mrf.mxu0
        %v576 = vpop.f32.mrf.mxu0
        %577 = vdwg.mxu0
        %v579 = vrot.slane %v573, 1
        %v581 = vadd.f32 %v573, %v579
        %v582 = vlaneseq
        %v583 = vshrl.u32 %v582, 7
        %v584 = vsub.s32 0, %v583
        %v585 = vrot.slane %v581, %v584
        %587 = vbcast.lane.b32.xlu0 %v585, 256
        %v588 = vpop.permute.xlu0 %587
        %s590 = sor.u32 256, 8
        %591 = vbcast.lane.b32.xlu0 %v585, %s590
        %v592 = vpop.permute.xlu0 %591
        %s594 = sor.u32 256, 16
        %595 = vbcast.lane.b32.xlu0 %v585, %s594
        %v596 = vpop.permute.xlu0 %595
        %s598 = sor.u32 256, 24
        %599 = vbcast.lane.b32.xlu0 %v585, %s598
        %v600 = vpop.permute.xlu0 %599
        %s602 = sor.u32 256, 32
        %603 = vbcast.lane.b32.xlu0 %v585, %s602
        %v604 = vpop.permute.xlu0 %603
        %s606 = sor.u32 256, 40
        %607 = vbcast.lane.b32.xlu0 %v585, %s606
        %v608 = vpop.permute.xlu0 %607
        %s610 = sor.u32 256, 48
        %611 = vbcast.lane.b32.xlu0 %v585, %s610
        %v612 = vpop.permute.xlu0 %611
        %s614 = sor.u32 256, 56
        %615 = vbcast.lane.b32.xlu0 %v585, %s614
        %v616 = vpop.permute.xlu0 %615
        %v617 = vmul.f32 %v264, %v588
        %v618 = vmul.f32 %v265, %v588
        %v619 = vmul.f32 %v266, %v592
        %v620 = vmul.f32 %v267, %v592
        %v621 = vmul.f32 %v268, %v596
        %v622 = vmul.f32 %v269, %v596
        %v623 = vmul.f32 %v270, %v600
        %v624 = vmul.f32 %v271, %v600
        %v625 = vmul.f32 %v272, %v604
        %v626 = vmul.f32 %v273, %v604
        %v627 = vmul.f32 %v274, %v608
        %v628 = vmul.f32 %v275, %v608
        %v629 = vmul.f32 %v276, %v612
        %v630 = vmul.f32 %v277, %v612
        %v631 = vmul.f32 %v278, %v616
        %v632 = vmul.f32 %v279, %v616
        %v633 = vadd.f32 %v617, %v619
        %v634 = vadd.f32 %v633, %v621
        %v635 = vadd.f32 %v634, %v623
        %v636 = vadd.f32 %v635, %v625
        %v637 = vadd.f32 %v636, %v627
        %v638 = vadd.f32 %v637, %v629
        %v639 = vadd.f32 %v638, %v631
        %v640 = vrot.slane %v639, 4
        %v641 = vadd.f32 %v639, %v640
        %v642 = vrot.slane %v641, 2
        %v643 = vadd.f32 %v641, %v642
        %v644 = vrot.slane %v643, 1
        %v645 = vadd.f32 %v643, %v644
        %v646 = vadd.f32 %v618, %v620
        %v647 = vadd.f32 %v646, %v622
        %v648 = vadd.f32 %v647, %v624
        %v649 = vadd.f32 %v648, %v626
        %v650 = vadd.f32 %v649, %v628
        %v651 = vadd.f32 %v650, %v630
        %v652 = vadd.f32 %v651, %v632
        %v653 = vrot.slane %v652, 4
        %v654 = vadd.f32 %v652, %v653
        %v655 = vrot.slane %v654, 2
        %v656 = vadd.f32 %v654, %v655
        %v657 = vrot.slane %v656, 1
        %v658 = vadd.f32 %v656, %v657
        %v659 = vrcp.pop 64.0
        %v660 = vmul.f32 %v645, %v659
        %v661 = vmul.f32 %v658, %v659
        %v662 = vmax.f32 %v617, %v621
        %v663 = vmax.f32 %v619, %v623
        %v664 = vmax.f32 %v662, %v625
        %v665 = vmax.f32 %v663, %v627
        %v666 = vmax.f32 %v664, %v629
        %v667 = vmax.f32 %v665, %v631
        %v668 = vmax.f32 %v666, %v667
        %v669 = vrot.slane %v668, 4
        %v670 = vmax.f32 %v668, %v669
        %v671 = vrot.slane %v670, 2
        %v672 = vmax.f32 %v670, %v671
        %v673 = vrot.slane %v672, 1
        %v674 = vmax.f32 %v672, %v673
        %v675 = vmax.f32 %v618, %v622
        %v676 = vmax.f32 %v620, %v624
        %v677 = vmax.f32 %v675, %v626
        %v678 = vmax.f32 %v676, %v628
        %v679 = vmax.f32 %v677, %v630
        %v680 = vmax.f32 %v678, %v632
        %v681 = vmax.f32 %v679, %v680
        %v682 = vrot.slane %v681, 4
        %v683 = vmax.f32 %v681, %v682
        %v684 = vrot.slane %v683, 2
        %v685 = vmax.f32 %v683, %v684
        %v686 = vrot.slane %v685, 1
        %v687 = vmax.f32 %v685, %v686
        %v688 = vpack.c.bf16 %v660, %v660
        %v689 = vpack.c.bf16 %v661, %v661
        %v690 = vpack.c.bf16 %v674, %v674
        %v691 = vpack.c.bf16 %v687, %v687
        %v692 = vld [vmem:[#allocation5] sm:$0xff]
        %v693 = vld [vmem:[#allocation5 + $0x8] sm:$0xff]
        %v694 = vld [vmem:[#allocation5 + $0x10] sm:$0xff]
        %v695 = vld [vmem:[#allocation5 + $0x18] sm:$0xff]
        %v696 = vld [vmem:[#allocation5 + $0x20] sm:$0xff]
        %v697 = vld [vmem:[#allocation5 + $0x28] sm:$0xff]
        %v698 = vld [vmem:[#allocation5 + $0x30] sm:$0xff]
        %v699 = vld [vmem:[#allocation5 + $0x38] sm:$0xff]
        %v700 = vld [vmem:[#allocation5 + $0x40] sm:$0xff]
        %v701 = vld [vmem:[#allocation5 + $0x48] sm:$0xff]
        %v702 = vld [vmem:[#allocation5 + $0x50] sm:$0xff]
        %v703 = vld [vmem:[#allocation5 + $0x58] sm:$0xff]
        %v704 = vld [vmem:[#allocation5 + $0x60] sm:$0xff]
        %v705 = vld [vmem:[#allocation5 + $0x68] sm:$0xff]
        %v706 = vld [vmem:[#allocation5 + $0x70] sm:$0xff]
        %v707 = vld [vmem:[#allocation5 + $0x78] sm:$0xff]
        %v708 = vld [vmem:[#allocation5 + $0x80] sm:$0xff]
        %v709 = vld [vmem:[#allocation5 + $0x88] sm:$0xff]
        %v710 = vld [vmem:[#allocation5 + $0x90] sm:$0xff]
        %v711 = vld [vmem:[#allocation5 + $0x98] sm:$0xff]
        %v712 = vld [vmem:[#allocation5 + $0xa0] sm:$0xff]
        %v713 = vld [vmem:[#allocation5 + $0xa8] sm:$0xff]
        %v714 = vld [vmem:[#allocation5 + $0xb0] sm:$0xff]
        %v715 = vld [vmem:[#allocation5 + $0xb8] sm:$0xff]
        %v716 = vld [vmem:[#allocation5 + $0xc0] sm:$0xff]
        %v717 = vld [vmem:[#allocation5 + $0xc8] sm:$0xff]
        %v718 = vld [vmem:[#allocation5 + $0xd0] sm:$0xff]
        %v719 = vld [vmem:[#allocation5 + $0xd8] sm:$0xff]
        %v720 = vld [vmem:[#allocation5 + $0xe0] sm:$0xff]
        %v721 = vld [vmem:[#allocation5 + $0xe8] sm:$0xff]
        %v722 = vld [vmem:[#allocation5 + $0xf0] sm:$0xff]
        %v723 = vld [vmem:[#allocation5 + $0xf8] sm:$0xff]
        %v724 = vld [vmem:[#allocation5 + $0x100] sm:$0xff]
        %v725 = vld [vmem:[#allocation5 + $0x108] sm:$0xff]
        %v726 = vld [vmem:[#allocation5 + $0x110] sm:$0xff]
        %v727 = vld [vmem:[#allocation5 + $0x118] sm:$0xff]
        %v728 = vld [vmem:[#allocation5 + $0x120] sm:$0xff]
        %v729 = vld [vmem:[#allocation5 + $0x128] sm:$0xff]
        %v730 = vld [vmem:[#allocation5 + $0x130] sm:$0xff]
        %v731 = vld [vmem:[#allocation5 + $0x138] sm:$0xff]
        %v732 = vld [vmem:[#allocation5 + $0x140] sm:$0xff]
        %v733 = vld [vmem:[#allocation5 + $0x148] sm:$0xff]
        %v734 = vld [vmem:[#allocation5 + $0x150] sm:$0xff]
        %v735 = vld [vmem:[#allocation5 + $0x158] sm:$0xff]
        %v736 = vld [vmem:[#allocation5 + $0x160] sm:$0xff]
        %v737 = vld [vmem:[#allocation5 + $0x168] sm:$0xff]
        %v738 = vld [vmem:[#allocation5 + $0x170] sm:$0xff]
        %v739 = vld [vmem:[#allocation5 + $0x178] sm:$0xff]
        %v740 = vld [vmem:[#allocation5 + $0x180] sm:$0xff]
        %v741 = vld [vmem:[#allocation5 + $0x188] sm:$0xff]
        %v742 = vld [vmem:[#allocation5 + $0x190] sm:$0xff]
        %v743 = vld [vmem:[#allocation5 + $0x198] sm:$0xff]
        %v744 = vld [vmem:[#allocation5 + $0x1a0] sm:$0xff]
        %v745 = vld [vmem:[#allocation5 + $0x1a8] sm:$0xff]
        %v746 = vld [vmem:[#allocation5 + $0x1b0] sm:$0xff]
        %v747 = vld [vmem:[#allocation5 + $0x1b8] sm:$0xff]
        %v748 = vld [vmem:[#allocation5 + $0x1c0] sm:$0xff]
        %v749 = vld [vmem:[#allocation5 + $0x1c8] sm:$0xff]
        %v750 = vld [vmem:[#allocation5 + $0x1d0] sm:$0xff]
        %v751 = vld [vmem:[#allocation5 + $0x1d8] sm:$0xff]
        %v752 = vld [vmem:[#allocation5 + $0x1e0] sm:$0xff]
        %v753 = vld [vmem:[#allocation5 + $0x1e8] sm:$0xff]
        %v754 = vld [vmem:[#allocation5 + $0x1f0] sm:$0xff]
        %v755 = vld [vmem:[#allocation5 + $0x1f8] sm:$0xff]
        %v820 = vunpack.c.l.b16 %v692
        %v821 = vunpack.c.h.b16 %v692
        %v822 = vunpack.c.l.b16 %v693
        %v823 = vunpack.c.h.b16 %v693
        %v824 = vunpack.c.l.b16 %v694
        %v825 = vunpack.c.h.b16 %v694
        %v826 = vunpack.c.l.b16 %v695
        %v827 = vunpack.c.h.b16 %v695
        %v828 = vunpack.c.l.b16 %v696
        %v829 = vunpack.c.h.b16 %v696
        %v830 = vunpack.c.l.b16 %v697
        %v831 = vunpack.c.h.b16 %v697
        %v832 = vunpack.c.l.b16 %v698
        %v833 = vunpack.c.h.b16 %v698
        %v834 = vunpack.c.l.b16 %v699
        %v835 = vunpack.c.h.b16 %v699
        %v836 = vunpack.c.l.b16 %v700
        %v837 = vunpack.c.h.b16 %v700
        %v838 = vunpack.c.l.b16 %v701
        %v839 = vunpack.c.h.b16 %v701
        %v840 = vunpack.c.l.b16 %v702
        %v841 = vunpack.c.h.b16 %v702
        %v842 = vunpack.c.l.b16 %v703
        %v843 = vunpack.c.h.b16 %v703
        %v844 = vunpack.c.l.b16 %v704
        %v845 = vunpack.c.h.b16 %v704
        %v846 = vunpack.c.l.b16 %v705
        %v847 = vunpack.c.h.b16 %v705
        %v848 = vunpack.c.l.b16 %v706
        %v849 = vunpack.c.h.b16 %v706
        %v850 = vunpack.c.l.b16 %v707
        %v851 = vunpack.c.h.b16 %v707
        %v852 = vunpack.c.l.b16 %v708
        %v853 = vunpack.c.h.b16 %v708
        %v854 = vunpack.c.l.b16 %v709
        %v855 = vunpack.c.h.b16 %v709
        %v856 = vunpack.c.l.b16 %v710
        %v857 = vunpack.c.h.b16 %v710
        %v858 = vunpack.c.l.b16 %v711
        %v859 = vunpack.c.h.b16 %v711
        %v860 = vunpack.c.l.b16 %v712
        %v861 = vunpack.c.h.b16 %v712
        %v862 = vunpack.c.l.b16 %v713
        %v863 = vunpack.c.h.b16 %v713
        %v864 = vunpack.c.l.b16 %v714
        %v865 = vunpack.c.h.b16 %v714
        %v866 = vunpack.c.l.b16 %v715
        %v867 = vunpack.c.h.b16 %v715
        %v868 = vunpack.c.l.b16 %v716
        %v869 = vunpack.c.h.b16 %v716
        %v870 = vunpack.c.l.b16 %v717
        %v871 = vunpack.c.h.b16 %v717
        %v872 = vunpack.c.l.b16 %v718
        %v873 = vunpack.c.h.b16 %v718
        %v874 = vunpack.c.l.b16 %v719
        %v875 = vunpack.c.h.b16 %v719
        %v876 = vunpack.c.l.b16 %v720
        %v877 = vunpack.c.h.b16 %v720
        %v878 = vunpack.c.l.b16 %v721
        %v879 = vunpack.c.h.b16 %v721
        %v880 = vunpack.c.l.b16 %v722
        %v881 = vunpack.c.h.b16 %v722
        %v882 = vunpack.c.l.b16 %v723
        %v883 = vunpack.c.h.b16 %v723
        %v884 = vunpack.c.l.b16 %v724
        %v885 = vunpack.c.h.b16 %v724
        %v886 = vunpack.c.l.b16 %v725
        %v887 = vunpack.c.h.b16 %v725
        %v888 = vunpack.c.l.b16 %v726
        %v889 = vunpack.c.h.b16 %v726
        %v890 = vunpack.c.l.b16 %v727
        %v891 = vunpack.c.h.b16 %v727
        %v892 = vunpack.c.l.b16 %v728
        %v893 = vunpack.c.h.b16 %v728
        %v894 = vunpack.c.l.b16 %v729
        %v895 = vunpack.c.h.b16 %v729
        %v896 = vunpack.c.l.b16 %v730
        %v897 = vunpack.c.h.b16 %v730
        %v898 = vunpack.c.l.b16 %v731
        %v899 = vunpack.c.h.b16 %v731
        %v900 = vunpack.c.l.b16 %v732
        %v901 = vunpack.c.h.b16 %v732
        %v902 = vunpack.c.l.b16 %v733
        %v903 = vunpack.c.h.b16 %v733
        %v904 = vunpack.c.l.b16 %v734
        %v905 = vunpack.c.h.b16 %v734
        %v906 = vunpack.c.l.b16 %v735
        %v907 = vunpack.c.h.b16 %v735
        %v908 = vunpack.c.l.b16 %v736
        %v909 = vunpack.c.h.b16 %v736
        %v910 = vunpack.c.l.b16 %v737
        %v911 = vunpack.c.h.b16 %v737
        %v912 = vunpack.c.l.b16 %v738
        %v913 = vunpack.c.h.b16 %v738
        %v914 = vunpack.c.l.b16 %v739
        %v915 = vunpack.c.h.b16 %v739
        %v916 = vunpack.c.l.b16 %v740
        %v917 = vunpack.c.h.b16 %v740
        %v918 = vunpack.c.l.b16 %v741
        %v919 = vunpack.c.h.b16 %v741
        %v920 = vunpack.c.l.b16 %v742
        %v921 = vunpack.c.h.b16 %v742
        %v922 = vunpack.c.l.b16 %v743
        %v923 = vunpack.c.h.b16 %v743
        %v924 = vunpack.c.l.b16 %v744
        %v925 = vunpack.c.h.b16 %v744
        %v926 = vunpack.c.l.b16 %v745
        %v927 = vunpack.c.h.b16 %v745
        %v928 = vunpack.c.l.b16 %v746
        %v929 = vunpack.c.h.b16 %v746
        %v930 = vunpack.c.l.b16 %v747
        %v931 = vunpack.c.h.b16 %v747
        %v932 = vunpack.c.l.b16 %v748
        %v933 = vunpack.c.h.b16 %v748
        %v934 = vunpack.c.l.b16 %v749
        %v935 = vunpack.c.h.b16 %v749
        %v936 = vunpack.c.l.b16 %v750
        %v937 = vunpack.c.h.b16 %v750
        %v938 = vunpack.c.l.b16 %v751
        %v939 = vunpack.c.h.b16 %v751
        %v940 = vunpack.c.l.b16 %v752
        %v941 = vunpack.c.h.b16 %v752
        %v942 = vunpack.c.l.b16 %v753
        %v943 = vunpack.c.h.b16 %v753
        %v944 = vunpack.c.l.b16 %v754
        %v945 = vunpack.c.h.b16 %v754
        %v946 = vunpack.c.l.b16 %v755
        %v947 = vunpack.c.h.b16 %v755
        %v948 = vpack.c.b16 %v822, %v820
        %v949 = vpack.c.b16 %v823, %v821
        %v950 = vpack.c.b16 %v826, %v824
        %v951 = vpack.c.b16 %v827, %v825
        %v952 = vpack.c.b16 %v830, %v828
        %v953 = vpack.c.b16 %v831, %v829
        %v954 = vpack.c.b16 %v834, %v832
        %v955 = vpack.c.b16 %v835, %v833
        %v956 = vpack.c.b16 %v838, %v836
        %v957 = vpack.c.b16 %v839, %v837
        %v958 = vpack.c.b16 %v842, %v840
        %v959 = vpack.c.b16 %v843, %v841
        %v960 = vpack.c.b16 %v846, %v844
        %v961 = vpack.c.b16 %v847, %v845
        %v962 = vpack.c.b16 %v850, %v848
        %v963 = vpack.c.b16 %v851, %v849
        %v964 = vpack.c.b16 %v854, %v852
        %v965 = vpack.c.b16 %v855, %v853
        %v966 = vpack.c.b16 %v858, %v856
        %v967 = vpack.c.b16 %v859, %v857
        %v968 = vpack.c.b16 %v862, %v860
        %v969 = vpack.c.b16 %v863, %v861
        %v970 = vpack.c.b16 %v866, %v864
        %v971 = vpack.c.b16 %v867, %v865
        %v972 = vpack.c.b16 %v870, %v868
        %v973 = vpack.c.b16 %v871, %v869
        %v974 = vpack.c.b16 %v874, %v872
        %v975 = vpack.c.b16 %v875, %v873
        %v976 = vpack.c.b16 %v878, %v876
        %v977 = vpack.c.b16 %v879, %v877
        %v978 = vpack.c.b16 %v882, %v880
        %v979 = vpack.c.b16 %v883, %v881
        %v980 = vpack.c.b16 %v886, %v884
        %v981 = vpack.c.b16 %v887, %v885
        %v982 = vpack.c.b16 %v890, %v888
        %v983 = vpack.c.b16 %v891, %v889
        %v984 = vpack.c.b16 %v894, %v892
        %v985 = vpack.c.b16 %v895, %v893
        %v986 = vpack.c.b16 %v898, %v896
        %v987 = vpack.c.b16 %v899, %v897
        %v988 = vpack.c.b16 %v902, %v900
        %v989 = vpack.c.b16 %v903, %v901
        %v990 = vpack.c.b16 %v906, %v904
        %v991 = vpack.c.b16 %v907, %v905
        %v992 = vpack.c.b16 %v910, %v908
        %v993 = vpack.c.b16 %v911, %v909
        %v994 = vpack.c.b16 %v914, %v912
        %v995 = vpack.c.b16 %v915, %v913
        %v996 = vpack.c.b16 %v918, %v916
        %v997 = vpack.c.b16 %v919, %v917
        %v998 = vpack.c.b16 %v922, %v920
        %v999 = vpack.c.b16 %v923, %v921
        %v1000 = vpack.c.b16 %v926, %v924
        %v1001 = vpack.c.b16 %v927, %v925
        %v1002 = vpack.c.b16 %v930, %v928
        %v1003 = vpack.c.b16 %v931, %v929
        %v1004 = vpack.c.b16 %v934, %v932
        %v1005 = vpack.c.b16 %v935, %v933
        %v1006 = vpack.c.b16 %v938, %v936
        %v1007 = vpack.c.b16 %v939, %v937
        %v1008 = vpack.c.b16 %v942, %v940
        %v1009 = vpack.c.b16 %v943, %v941
        %v1010 = vpack.c.b16 %v946, %v944
        %v1011 = vpack.c.b16 %v947, %v945
        %1076 = vmatprep.subr.bf16.mxu0 %v963
        %1077 = vmatpush1.bf16.msra.mxu0 %v962
        %1078 = vmatprep.subr.bf16.mxu0 %v961
        %1079 = vmatpush1.bf16.msra.mxu0 %v960
        %1080 = vmatprep.subr.bf16.mxu0 %v959
        %1081 = vmatpush1.bf16.msra.mxu0 %v958
        %1082 = vmatprep.subr.bf16.mxu0 %v957
        %1083 = vmatpush1.bf16.msra.mxu0 %v956
        %1084 = vmatprep.subr.bf16.mxu0 %v955
        %1085 = vmatpush1.bf16.msra.mxu0 %v954
        %1086 = vmatprep.subr.bf16.mxu0 %v953
        %1087 = vmatpush1.bf16.msra.mxu0 %v952
        %1088 = vmatprep.subr.bf16.mxu0 %v951
        %1089 = vmatpush1.bf16.msra.mxu0 %v950
        %1090 = vmatprep.subr.bf16.mxu0 %v949
        %1091 = vmatpush1.bf16.msra.mxu0 %v948
        %1092 = vmatprep.subr.bf16.mxu0 %v979
        %1093 = vmatpush2.bf16.msra.mxu0 %v978
        %1094 = vmatprep.subr.bf16.mxu0 %v977
        %1095 = vmatpush2.bf16.msra.mxu0 %v976
        %1096 = vmatprep.subr.bf16.mxu0 %v975
        %1097 = vmatpush2.bf16.msra.mxu0 %v974
        %1098 = vmatprep.subr.bf16.mxu0 %v973
        %1099 = vmatpush2.bf16.msra.mxu0 %v972
        %1100 = vmatprep.subr.bf16.mxu0 %v971
        %1101 = vmatpush2.bf16.msra.mxu0 %v970
        %1102 = vmatprep.subr.bf16.mxu0 %v969
        %1103 = vmatpush2.bf16.msra.mxu0 %v968
        %1104 = vmatprep.subr.bf16.mxu0 %v967
        %1105 = vmatpush2.bf16.msra.mxu0 %v966
        %1106 = vmatprep.subr.bf16.mxu0 %v965
        %1107 = vmatpush2.bf16.msra.mxu0 %v964
        %1108 = vmatprep.mubr.bf16.mxu0 %v689
        %1109 = vmatmul.mubr.bf16.gmra.mxu0 %v688
        %v1110 = vpop.f32.mrf.mxu0
        %v1111 = vadd.f32 0.0, %v1110
        %v1112 = vpop.f32.mrf.mxu0
        %v1113 = vadd.f32 0.0, %v1112
        %v1114 = vpop.f32.mrf.mxu0
        %v1115 = vpop.f32.mrf.mxu0
        %1116 = vdwg.mxu0
        %1117 = vmatprep.subr.bf16.mxu0 %v995
        %1118 = vmatpush1.bf16.msra.mxu0 %v994
        %1119 = vmatprep.subr.bf16.mxu0 %v993
        %1120 = vmatpush1.bf16.msra.mxu0 %v992
        %1121 = vmatprep.subr.bf16.mxu0 %v991
        %1122 = vmatpush1.bf16.msra.mxu0 %v990
        %1123 = vmatprep.subr.bf16.mxu0 %v989
        %1124 = vmatpush1.bf16.msra.mxu0 %v988
        %1125 = vmatprep.subr.bf16.mxu0 %v987
        %1126 = vmatpush1.bf16.msra.mxu0 %v986
        %1127 = vmatprep.subr.bf16.mxu0 %v985
        %1128 = vmatpush1.bf16.msra.mxu0 %v984
        %1129 = vmatprep.subr.bf16.mxu0 %v983
        %1130 = vmatpush1.bf16.msra.mxu0 %v982
        %1131 = vmatprep.subr.bf16.mxu0 %v981
        %1132 = vmatpush1.bf16.msra.mxu0 %v980
        %1133 = vmatprep.subr.bf16.mxu0 %v1011
        %1134 = vmatpush2.bf16.msra.mxu0 %v1010
        %1135 = vmatprep.subr.bf16.mxu0 %v1009
        %1136 = vmatpush2.bf16.msra.mxu0 %v1008
        %1137 = vmatprep.subr.bf16.mxu0 %v1007
        %1138 = vmatpush2.bf16.msra.mxu0 %v1006
        %1139 = vmatprep.subr.bf16.mxu0 %v1005
        %1140 = vmatpush2.bf16.msra.mxu0 %v1004
        %1141 = vmatprep.subr.bf16.mxu0 %v1003
        %1142 = vmatpush2.bf16.msra.mxu0 %v1002
        %1143 = vmatprep.subr.bf16.mxu0 %v1001
        %1144 = vmatpush2.bf16.msra.mxu0 %v1000
        %1145 = vmatprep.subr.bf16.mxu0 %v999
        %1146 = vmatpush2.bf16.msra.mxu0 %v998
        %1147 = vmatprep.subr.bf16.mxu0 %v997
        %1148 = vmatpush2.bf16.msra.mxu0 %v996
        %1149 = vmatprep.mubr.bf16.mxu0 %v691
        %1150 = vmatmul.mubr.bf16.gmra.mxu0 %v690
        %v1151 = vpop.f32.mrf.mxu0
        %v1152 = vadd.f32 %v1111, %v1151
        %v1153 = vpop.f32.mrf.mxu0
        %v1154 = vadd.f32 %v1113, %v1153
        %v1155 = vpop.f32.mrf.mxu0
        %v1156 = vpop.f32.mrf.mxu0
        %1157 = vdwg.mxu0
        %vm1158 = vcmp.ne.f32.partialorder %v1152, %v1152
        %vm1159 = vcmp.ne.f32.partialorder %v1154, %v1154
        %v1160 = vsel %vm1158, 0.0, %v1152
        %v1161 = vsel %vm1159, 0.0, %v1154
        %v1162 = vsub.f32 0.0, %v1160
        %v1163 = vsub.f32 0.0, %v1161
        %v1164 = vmul.f32 %v1162, 1.442695
        %v1165 = vpow.pop %v1164
        %v1166 = vmul.f32 %v1163, 1.442695
        %v1167 = vpow.pop %v1166
        %v1168 = vadd.f32 %v1165, 1.0
        %v1169 = vadd.f32 %v1167, 1.0
        %v1170 = vrcp.pop %v1168
        %v1171 = vrcp.pop %v1169
        %v1174 = vcombine.low %v1170, %v1171
        %v1176 = vunpack.c.l.s4 1966171168
        %v1177 = vunpack.c.0.s8 %v1176
        %v1178 = vlaneseq
        %v1179 = vshrl.u32 %v1178, 7
        %v1180 = vsub.s32 %v1177, %v1179
        %v1181 = vrot.slane %v1174, %v1180
        %v1183 = vunpack.c.l.s4 1966171168
        %v1184 = vunpack.c.0.s8 %v1183
        %v1185 = vlaneseq
        %v1186 = vshrl.u32 %v1185, 7
        %v1187 = vsub.s32 %v1184, %v1186
        %v1188 = vrot.slane %v1181, %v1187
        %v1190 = vlaneseq
        %vm1191 = vcmp.ge.s32.totalorder %v1190, 0
        %vm1192 = vcmp.lt.s32.totalorder %v1190, 256
        %vm1193 = vmand %vm1191, %vm1192
        %1194 = vst.msk [vmem:[%s230] sm:$0x3] %vm1193, %v1188
        %s1195 = sand.u32 %s119, 1
        %s1196 = scalar_lea.sflag [#allocation4], %s1195
        %s1197 = sand.u32 %s119, 1
        %s1198 = smul.addr %s1197, 2
        %s1199 = scalar_lea.vmem [#allocation7], %s1198
        // Predicated region
        $region45: #{tpu_custom_call.1} parent=35 // pred_check
          %p1200 = pneg %p129
        $region46: #{tpu_custom_call.1} parent=35 // pred_check_branch
          %1202 = sbr.rel (%p1200) target = $region48
        $region47: #{tpu_custom_call.1} parent=35 // pred_region
          %s1204 = ssub.s32 32, 32
          %1205 = vsyncadd %s1196, %s1204
          %s1206 = smul.addr %s22, 2
          %s1207 = smul.addr %s1206, 16
          %s1208 = scalar_lea.hbm %s4, %s1207
          %s1210 = sshll.u32 %s1199, 4
          %s1211 = int_to_ptr.vmem [resolvable:$true] %s1210
          %1213 = dma.vmem_to_hbm [thread:$0]  %s1211, 32, %s1208, %s1196
        $region48: #{tpu_custom_call.1} parent=35 // pred_fallthru
          _
      $region36: #{tpu_custom_call.1} parent=5 // pred_fallthru
        _
      %p1214 = scmp.le.s32.totalorder 2, %s17
      // Predicated region
      $region49: #{tpu_custom_call.1} parent=5 // pred_check
        %p1215 = pneg %p1214
      $region50: #{tpu_custom_call.1} parent=5 // pred_check_branch
        %1217 = sbr.rel (%p1215) target = $region52
      $region51: #{tpu_custom_call.1} parent=5 // pred_region
        %s1218 = ssub.s32 %s17, 2
        // Predicated region
        $region53: #{tpu_custom_call.1} parent=51 // pred_check
          %p1219 = pneg %p135
        $region54: #{tpu_custom_call.1} parent=51 // pred_check_branch
          %1221 = sbr.rel (%p1219) target = $region56
        $region55: #{tpu_custom_call.1} parent=51 // pred_region
          %s1222 = sand.u32 %s120, 1
          %s1223 = scalar_lea.sflag [#allocation4], %s1222
          %s1224 = sand.u32 %s120, 1
          %s1225 = smul.addr %s1224, 2
          %s1226 = scalar_lea.vmem [#allocation7], %s1225
          %1227 = dma.done %s1223, 32
        $region56: #{tpu_custom_call.1} parent=51 // pred_fallthru
          _
      $region52: #{tpu_custom_call.1} parent=5 // pred_fallthru
        _
    $region6: #{tpu_custom_call.1} parent=1 // loop_footer
      %s21 = sadd.s32 1, %s17
    $region7: #{tpu_custom_call.1} parent=1 // loop_footer_branch
      %16 = sbr.rel target = $region3
    $region8: #{tpu_custom_call.1} parent=1 // loop_exit
      _
    %1228 = vsyncpa [#allocation3], 1
    %s1229 = scalar_lea.sflag [#allocation3], 1
    %1230 = vsyncpa %s1229, 1
    %1231 = vsyncpa [#allocation6], 1
    %1232 = vsyncpa [#allocation4], 1
    %s1233 = scalar_lea.sflag [#allocation4], 1
    %1234 = vsyncpa %s1233, 1

</llo_original>
